<compile_context>
chip_gen: v5e
topology: v5e:2x2
jax: 0.10.0
libtpu: 0.0.40
codegen_flags: <defaults>
</compile_context>

<pallas_src>
import functools

import jax
import jax.numpy as jnp
from jax.experimental import pallas as pl
from jax.experimental.pallas import tpu as pltpu

_HAS_BUFFERED = hasattr(pl, "Buffered")


def _bert_head_transform_kernel(x_ref, wt_ref, b_ref, g_ref, beta_ref, o_ref, *, eps, act):
    # x_ref:    (tm, H)  tile of flattened hidden_states (native dtype)
    # wt_ref:   (H, H)   dense weight pre-transposed to (in, out) layout (resident)
    # b_ref:    (1, H)   dense bias
    # g_ref:    (1, H)   LayerNorm gamma
    # beta_ref: (1, H)   LayerNorm beta
    x = x_ref[...]
    wt = wt_ref[...]

    # Linear: x @ W^T, with W^T materialized once on the host -> plain MXU contraction
    # (no in-kernel transpose of the resident weight), f32 accumulation.
    h = jnp.dot(x, wt, preferred_element_type=jnp.float32)
    h = h + b_ref[...].astype(jnp.float32)

    if act == "gelu_tanh":
        # tanh approximation: tanh lowers to the EUP (separate bundle slot), which
        # un-saturates the VALU on v6e/v7x where the erf polynomial would otherwise bind.
        c0 = jnp.float32(0.7978845608028654)  # sqrt(2/pi)
        c1 = jnp.float32(0.044715)
        h = jnp.float32(0.5) * h * (jnp.float32(1.0) + jnp.tanh(c0 * (h + c1 * h * h * h)))
    else:
        # Exact erf GELU (torch.nn.GELU default / HF ACT2FN["gelu"]).
        inv_sqrt2 = jnp.float32(0.7071067811865476)
        h = jnp.float32(0.5) * h * (jnp.float32(1.0) + jax.lax.erf(h * inv_sqrt2))

    # LayerNorm over the hidden (lane) axis — centered two-pass variance (no cancellation).
    inv_h = jnp.float32(1.0 / h.shape[-1])
    mean = jnp.sum(h, axis=-1, keepdims=True) * inv_h
    c = h - mean
    var = jnp.sum(c * c, axis=-1, keepdims=True) * inv_h
    inv = jax.lax.rsqrt(var + jnp.float32(eps))

    out = c * inv * g_ref[...].astype(jnp.float32) + beta_ref[...].astype(jnp.float32)
    o_ref[...] = out.astype(o_ref.dtype)


def _round_up(x, m):
    return ((x + m - 1) // m) * m


def _vmem_budget_bytes():
    """Generation-aware VMEM budget: ~75% of per-core VMEM, leaving compiler headroom."""
    try:
        cap = int(pltpu.get_tpu_info().vmem_capacity_bytes)
    except Exception:
        cap = 64 * 1024 * 1024  # hardware query unavailable: assume v7x per-TC VMEM (64 MiB)
    return int(cap * 3 // 4)    # v5e/v6e -> ~96 MiB, v7x -> ~48 MiB


def _pick_row_tile(M, H, x_bytes, w_bytes, o_bytes, tm_req, budget, w_copies):
    """Largest row tile <= tm_req (multiple of 8) whose working set fits the VMEM budget.

    Floor is 256 (MXU-shaped on v6e/v7x, >=128 for v5e) unless the row count itself is smaller;
    only drops below that as a last resort for very large H.
    """
    m8 = _round_up(max(M, 1), 8)
    tm = min(_round_up(max(tm_req, 8), 8), m8)
    floor = min(256, m8)

    def est(t):
        weight = w_copies * H * H * w_bytes   # resident weight (1x when single-buffered)
        x_tiles = 2 * t * H * x_bytes         # double-buffered input row tile
        o_tiles = 2 * t * H * o_bytes         # double-buffered output row tile
        f32_tmp = 2 * t * H * 4               # margin: f32 matmul result + centered intermediate
        vecs = 8 * H * 4                      # bias / gamma / beta
        return weight + x_tiles + o_tiles + f32_tmp + vecs

    while tm > floor and est(tm) > budget:
        tm = max(floor, _round_up(tm // 2, 8))
    while tm > 8 and est(tm) > budget:        # last resort (huge H): VMEM fit trumps MXU shape
        tm = max(8, _round_up(tm // 2, 8))
    return tm, est(tm)


def bert_prediction_head_transform(hidden_states, w, b, gamma, beta, *,
                                   eps=1e-12, hidden_act="gelu", tm=512,
                                   cast_operands_to_bf16=False):
    """Fused dense(H->H) + GELU + LayerNorm.

    hidden_states: (B, S, H).  w: (H, H) in PyTorch nn.Linear (out, in) layout.
    b / gamma / beta: (H,).  hidden_act: "gelu" (exact erf) or "gelu_tanh" / "gelu_new".
    cast_operands_to_bf16: cast x / W to bf16 for the MXU (f32 accumulation & epilogue kept).
    """
    if callable(hidden_act):
        # TODO(synk): arbitrary callable activations (config.hidden_act as a function) are not
        # fusable here; only the "gelu" / "gelu_tanh" string forms are implemented.
        raise NotImplementedError("callable hidden_act is not supported in the fused kernel")
    act = "gelu_tanh" if hidden_act in ("gelu_tanh", "gelu_new", "tanh") else "gelu"

    B, S, H = hidden_states.shape
    M = B * S
    out_dtype = hidden_states.dtype

    x2d = hidden_states.reshape(M, H)
    # One-time host transpose to (in, out): the kernel contracts x dim 1 with W_t dim 0,
    # so no per-step transpose of the resident weight tile is ever emitted.
    w_t = jnp.transpose(w)
    if cast_operands_to_bf16:
        x2d = x2d.astype(jnp.bfloat16)
        w_t = w_t.astype(jnp.bfloat16)

    b2d = b.reshape(1, H)
    g2d = gamma.reshape(1, H)
    beta2d = beta.reshape(1, H)

    budget = _vmem_budget_bytes()
    w_copies = 1 if _HAS_BUFFERED else 2
    tm_eff, vmem_need = _pick_row_tile(
        M, H,
        jnp.dtype(x2d.dtype).itemsize, jnp.dtype(w_t.dtype).itemsize,
        jnp.dtype(out_dtype).itemsize, tm, budget, w_copies)

    grid = (pl.cdiv(M, tm_eff),)  # ragged final tile is masked by Pallas — no host-side pad
    # Weight / bias / gamma / beta have a constant block index across the grid -> single buffer.
    const_kw = {"pipeline_mode": pl.Buffered(1)} if _HAS_BUFFERED else {}

    kernel = functools.partial(_bert_head_transform_kernel, eps=float(eps), act=act)
    vmem_limit = int(min(budget, max(2 * vmem_need, 32 * 1024 * 1024)))

    out2d = pl.pallas_call(
        kernel,
        out_shape=jax.ShapeDtypeStruct((M, H), out_dtype),
        grid_spec=pltpu.PrefetchScalarGridSpec(
            num_scalar_prefetch=0,
            grid=grid,
            in_specs=[
                pl.BlockSpec((tm_eff, H), lambda i: (i, 0)),          # x row tile
                pl.BlockSpec((H, H), lambda i: (0, 0), **const_kw),   # W^T (resident)
                pl.BlockSpec((1, H), lambda i: (0, 0), **const_kw),   # bias
                pl.BlockSpec((1, H), lambda i: (0, 0), **const_kw),   # gamma
                pl.BlockSpec((1, H), lambda i: (0, 0), **const_kw),   # beta
            ],
            out_specs=pl.BlockSpec((tm_eff, H), lambda i: (i, 0)),
        ),
        compiler_params=pltpu.CompilerParams(
            # Row tiles are independent -> shard across TensorCores on v7x / megacore.
            # TODO(synk): if an xprof trace on v7x shows one TC idle, switch this axis to
            # pltpu.CORE_PARALLEL.
            dimension_semantics=("parallel",),
            vmem_limit_bytes=vmem_limit,
        ),
    )(x2d, w_t, b2d, g2d, beta2d)

    return out2d.reshape(B, S, H)


def _reference(hidden_states, w, b, gamma, beta, eps=1e-12, hidden_act="gelu"):
    h = jnp.einsum("bsh,oh->bso", hidden_states, w) + b
    if hidden_act in ("gelu_tanh", "gelu_new", "tanh"):
        h = 0.5 * h * (1.0 + jnp.tanh(0.7978845608028654 * (h + 0.044715 * h ** 3)))
    else:
        h = 0.5 * h * (1.0 + jax.lax.erf(h / jnp.sqrt(2.0)))
    mean = jnp.mean(h, axis=-1, keepdims=True)
    var = jnp.mean((h - mean) ** 2, axis=-1, keepdims=True)
    hn = (h - mean) * jax.lax.rsqrt(var + eps)
    return hn * gamma + beta


if __name__ == "__main__":
    # Small BERT-like config: batch=2, seq=8, hidden=32
    B, S, H = 2, 8, 32
    key = jax.random.PRNGKey(0)
    k_x, k_w, k_b, k_g, k_beta = jax.random.split(key, 5)

    x = jax.random.normal(k_x, (B, S, H), dtype=jnp.float32)
    # Deterministic synthetic parameters (nn.Linear(H, H) + nn.LayerNorm(H))
    w = jax.random.normal(k_w, (H, H), dtype=jnp.float32) * 0.02  # (out, in) PyTorch layout
    b = jax.random.normal(k_b, (H,), dtype=jnp.float32) * 0.02
    gamma = 1.0 + 0.1 * jax.random.normal(k_g, (H,), dtype=jnp.float32)
    beta = 0.1 * jax.random.normal(k_beta, (H,), dtype=jnp.float32)

    # Exact-erf GELU (module default) and tanh GELU (EUP path) both checked vs reference.
    for act in ("gelu", "gelu_tanh"):
        out = bert_prediction_head_transform(x, w, b, gamma, beta, eps=1e-12, hidden_act=act)
        out = jax.block_until_ready(out)
        ref = _reference(x, w, b, gamma, beta, eps=1e-12, hidden_act=act)
        assert out.shape == (B, S, H)
        assert jnp.allclose(out, ref, atol=2e-5, rtol=2e-5), f"mismatch vs reference ({act})"

    # Ragged-row case (M = 15 not a multiple of the row tile) exercises the masked final tile.
    Br, Sr = 3, 5
    xr = jax.random.normal(key, (Br, Sr, H), dtype=jnp.float32)
    out_r = jax.block_until_ready(
        bert_prediction_head_transform(xr, w, b, gamma, beta, eps=1e-12))
    ref_r = _reference(xr, w, b, gamma, beta, eps=1e-12)
    assert out_r.shape == (Br, Sr, H)
    assert jnp.allclose(out_r, ref_r, atol=2e-5, rtol=2e-5), "mismatch vs reference (ragged M)"

    print("KERNEL_OK")
</pallas_src>

<mosaic_0001>
module attributes {stable_mosaic.version = 11 : i64} {
  func.func @_bert_head_transform_kernel(%arg0: i32, %arg1: memref<16x32xf32, #tpu.memory_space<vmem>>, %arg2: memref<32x32xf32, #tpu.memory_space<vmem>>, %arg3: memref<1x32xf32, #tpu.memory_space<vmem>>, %arg4: memref<1x32xf32, #tpu.memory_space<vmem>>, %arg5: memref<1x32xf32, #tpu.memory_space<vmem>>, %arg6: memref<16x32xf32, #tpu.memory_space<vmem>>) attributes {dimension_semantics = [#tpu.dimension_semantics<parallel>], iteration_bounds = array<i64: 1>, scalar_prefetch = 0 : i64, scratch_operands = 0 : i64, tpu.core_type = #tpu.core_type<tc>, window_params = [{transform_indices = @transform_0, window_bounds = array<i64: 16, 32>}, {pipeline_mode = #tpu.pipeline_mode<synchronous>, transform_indices = @transform_1, window_bounds = array<i64: 32, 32>}, {pipeline_mode = #tpu.pipeline_mode<synchronous>, transform_indices = @transform_2, window_bounds = array<i64: 1, 32>}, {pipeline_mode = #tpu.pipeline_mode<synchronous>, transform_indices = @transform_3, window_bounds = array<i64: 1, 32>}, {pipeline_mode = #tpu.pipeline_mode<synchronous>, transform_indices = @transform_4, window_bounds = array<i64: 1, 32>}, {transform_indices = @transform_5, window_bounds = array<i64: 16, 32>}]} {
    %c0 = arith.constant 0 : index
    %c0_0 = arith.constant 0 : index
    %0 = vector.load %arg1[%c0, %c0_0] : memref<16x32xf32, #tpu.memory_space<vmem>>, vector<16x32xf32>
    %c0_1 = arith.constant 0 : index
    %c0_2 = arith.constant 0 : index
    %1 = vector.load %arg2[%c0_1, %c0_2] : memref<32x32xf32, #tpu.memory_space<vmem>>, vector<32x32xf32>
    %cst = arith.constant dense<0.000000e+00> : vector<16x32xf32>
    %2 = tpu.matmul %0, %1, %cst {dimension_numbers = #tpu.dot_dimension_numbers<[1], [0], [0], [1], [0, 0, 1, 1], [], []>} : vector<16x32xf32>, vector<32x32xf32>, vector<16x32xf32> -> vector<16x32xf32>
    %c0_3 = arith.constant 0 : index
    %c0_4 = arith.constant 0 : index
    %3 = vector.load %arg3[%c0_3, %c0_4] : memref<1x32xf32, #tpu.memory_space<vmem>>, vector<1x32xf32>
    %4 = vector.broadcast %3 : vector<1x32xf32> to vector<16x32xf32>
    %5 = arith.addf %2, %4 : vector<16x32xf32>
    %cst_5 = arith.constant 5.000000e-01 : f32
    %6 = vector.broadcast %cst_5 : f32 to vector<16x32xf32>
    %7 = arith.mulf %6, %5 : vector<16x32xf32>
    %cst_6 = arith.constant 0.707106769 : f32
    %8 = vector.broadcast %cst_6 : f32 to vector<16x32xf32>
    %9 = arith.mulf %5, %8 : vector<16x32xf32>
    %10 = math.erf %9 : vector<16x32xf32>
    %cst_7 = arith.constant 1.000000e+00 : f32
    %11 = vector.broadcast %cst_7 : f32 to vector<16x32xf32>
    %12 = arith.addf %11, %10 : vector<16x32xf32>
    %13 = arith.mulf %7, %12 : vector<16x32xf32>
    %cst_8 = arith.constant dense<0.000000e+00> : vector<16xf32>
    %14 = vector.multi_reduction <add>, %13, %cst_8 [1] : vector<16x32xf32> to vector<16xf32>
    %15 = vector.shape_cast %14 : vector<16xf32> to vector<16x1xf32>
    %cst_9 = arith.constant 3.125000e-02 : f32
    %16 = vector.broadcast %cst_9 : f32 to vector<16x1xf32>
    %17 = arith.mulf %15, %16 : vector<16x1xf32>
    %18 = vector.broadcast %17 : vector<16x1xf32> to vector<16x32xf32>
    %19 = arith.subf %13, %18 : vector<16x32xf32>
    %20 = arith.mulf %19, %19 : vector<16x32xf32>
    %cst_10 = arith.constant dense<0.000000e+00> : vector<16xf32>
    %21 = vector.multi_reduction <add>, %20, %cst_10 [1] : vector<16x32xf32> to vector<16xf32>
    %22 = vector.shape_cast %21 : vector<16xf32> to vector<16x1xf32>
    %cst_11 = arith.constant 3.125000e-02 : f32
    %23 = vector.broadcast %cst_11 : f32 to vector<16x1xf32>
    %24 = arith.mulf %22, %23 : vector<16x1xf32>
    %cst_12 = arith.constant 9.99999996E-13 : f32
    %25 = vector.broadcast %cst_12 : f32 to vector<16x1xf32>
    %26 = arith.addf %24, %25 : vector<16x1xf32>
    %27 = math.rsqrt %26 : vector<16x1xf32>
    %28 = vector.broadcast %27 : vector<16x1xf32> to vector<16x32xf32>
    %29 = arith.mulf %19, %28 : vector<16x32xf32>
    %c0_13 = arith.constant 0 : index
    %c0_14 = arith.constant 0 : index
    %30 = vector.load %arg4[%c0_13, %c0_14] : memref<1x32xf32, #tpu.memory_space<vmem>>, vector<1x32xf32>
    %31 = vector.broadcast %30 : vector<1x32xf32> to vector<16x32xf32>
    %32 = arith.mulf %29, %31 : vector<16x32xf32>
    %c0_15 = arith.constant 0 : index
    %c0_16 = arith.constant 0 : index
    %33 = vector.load %arg5[%c0_15, %c0_16] : memref<1x32xf32, #tpu.memory_space<vmem>>, vector<1x32xf32>
    %34 = vector.broadcast %33 : vector<1x32xf32> to vector<16x32xf32>
    %35 = arith.addf %32, %34 : vector<16x32xf32>
    %c0_17 = arith.constant 0 : index
    %c0_18 = arith.constant 0 : index
    %36 = vector.load %arg6[%c0_17, %c0_18] : memref<16x32xf32, #tpu.memory_space<vmem>>, vector<16x32xf32>
    tpu.vector_store %arg6[%c0_17, %c0_18], %35 {strides = array<i32>} : memref<16x32xf32, #tpu.memory_space<vmem>>, vector<16x32xf32>,
    return
  }
  func.func @transform_0(%arg0: i32) -> (i32, i32) {
    %c0_i32 = arith.constant 0 : i32
    %c0_i32_0 = arith.constant 0 : i32
    return %arg0, %c0_i32 : i32, i32
  }
  func.func @transform_1(%arg0: i32) -> (i32, i32) {
    %c0_i32 = arith.constant 0 : i32
    %c0_i32_0 = arith.constant 0 : i32
    %c0_i32_1 = arith.constant 0 : i32
    return %c0_i32, %c0_i32_0 : i32, i32
  }
  func.func @transform_2(%arg0: i32) -> (i32, i32) {
    %c0_i32 = arith.constant 0 : i32
    %c0_i32_0 = arith.constant 0 : i32
    %c0_i32_1 = arith.constant 0 : i32
    return %c0_i32, %c0_i32_0 : i32, i32
  }
  func.func @transform_3(%arg0: i32) -> (i32, i32) {
    %c0_i32 = arith.constant 0 : i32
    %c0_i32_0 = arith.constant 0 : i32
    %c0_i32_1 = arith.constant 0 : i32
    return %c0_i32, %c0_i32_0 : i32, i32
  }
  func.func @transform_4(%arg0: i32) -> (i32, i32) {
    %c0_i32 = arith.constant 0 : i32
    %c0_i32_0 = arith.constant 0 : i32
    %c0_i32_1 = arith.constant 0 : i32
    return %c0_i32, %c0_i32_0 : i32, i32
  }
  func.func @transform_5(%arg0: i32) -> (i32, i32) {
    %c0_i32 = arith.constant 0 : i32
    %c0_i32_0 = arith.constant 0 : i32
    return %arg0, %c0_i32 : i32, i32
  }
}

</mosaic_0001>

<llo_original>
// kernel: tpu_custom_call.1
$region0: #{tpu_custom_call.1}
  #allocation0 [shape = 'u32[]', space=smem, size = 0x4, offset = 0x4, fixed_abs, tag = 'smem constant byte address 0x4 - core index']
  #allocation1 [shape = 'u32[72,128]{1,0:T(1,128)}', space=vmem, size = 0x9000, scoped, tag = 'internal scratch']
  %s0 = inlined_call_operand.hbm [shape: f32[16,32], index: 0, kind: input, shape index: {}]
  %s1 = inlined_call_operand.hbm [shape: f32[32,32], index: 1, kind: input, shape index: {}]
  %s2 = inlined_call_operand.vmem [shape: f32[1,32], index: 2, kind: input, shape index: {}]
  %s3 = inlined_call_operand.vmem [shape: f32[1,32], index: 3, kind: input, shape index: {}]
  %s4 = inlined_call_operand.vmem [shape: f32[1,32], index: 4, kind: input, shape index: {}]
  %s5 = inlined_call_operand.hbm [shape: f32[16,32], index: 5, kind: output, shape index: {}]
  %s6 = sld [smem:[#allocation0]]
  $region38: #{tpu_custom_call.1} parent=0
    _
  %s8 = ssub.s32 1, %s6
  %s9 = scalar_select 0, %s8, %s6
  $region1: #{tpu_custom_call.1} parent=0
    #allocation2 [shape = 'u8[8192]{0}', space=vmem, size = 0x2000, scoped, tag = 'input window, operand 0, single buffered']
    #allocation3 [shape = 's32[1]{0}', space=sflag, size = 0x4, scoped, tag = 'scoped memory for tpu_custom_call.1']
    #allocation4 [shape = 's32[1]{0}', space=sflag, size = 0x4, scoped, tag = 'scoped memory for tpu_custom_call.1']
    #allocation5 [shape = 'u8[16384]{0}', space=vmem, size = 0x4000, scoped, tag = 'input window, operand 1, single buffered']
    #allocation6 [shape = 's32[1]{0}', space=sflag, size = 0x4, scoped, tag = 'scoped memory for tpu_custom_call.1']
    #allocation7 [shape = 'u8[8192]{0}', space=vmem, size = 0x2000, scoped, tag = 'output window, operand 0, single buffered']
    %10 = vsyncpa [#allocation3], 0
    %11 = vsyncpa [#allocation6], 0
    %12 = vsyncpa [#allocation4], 0
    // Predicated region
    $region2: #{tpu_custom_call.1} parent=1 // pred_check
      _
    $region3: #{tpu_custom_call.1} parent=1 // pred_check_branch
      %14 = sbr.rel (0) target = $region5
    $region4: #{tpu_custom_call.1} parent=1 // pred_region
      %16 = vsyncadd [#allocation3], 0
      %s17 = sshll.u32 %s0, 4
      %s18 = int_to_ptr.hbm [resolvable:$true] %s17
      %s19 = sshll.u32 [#allocation2], 4
      %s20 = int_to_ptr.vmem [resolvable:$true] %s19
      %25 = dma.hbm_to_vmem [thread:$0]  %s18, 256, %s20, [#allocation3], 128, 128, 8
    $region5: #{tpu_custom_call.1} parent=1 // pred_fallthru
      _
    // Predicated region
    $region6: #{tpu_custom_call.1} parent=1 // pred_check
      _
    $region7: #{tpu_custom_call.1} parent=1 // pred_check_branch
      %27 = sbr.rel (0) target = $region9
    $region8: #{tpu_custom_call.1} parent=1 // pred_region
      %29 = vsyncadd [#allocation6], 0
      %s30 = sshll.u32 %s1, 4
      %s31 = int_to_ptr.hbm [resolvable:$true] %s30
      %s32 = sshll.u32 [#allocation5], 4
      %s33 = int_to_ptr.vmem [resolvable:$true] %s32
      %38 = dma.hbm_to_vmem [thread:$0]  %s31, 512, %s33, [#allocation6], 128, 128, 8
    $region9: #{tpu_custom_call.1} parent=1 // pred_fallthru
      _
    // Predicated region
    $region10: #{tpu_custom_call.1} parent=1 // pred_check
      _
    $region11: #{tpu_custom_call.1} parent=1 // pred_check_branch
      %40 = sbr.rel (0) target = $region13
    $region12: #{tpu_custom_call.1} parent=1 // pred_region
      _
    $region13: #{tpu_custom_call.1} parent=1 // pred_fallthru
      _
    // Predicated region
    $region14: #{tpu_custom_call.1} parent=1 // pred_check
      _
    $region15: #{tpu_custom_call.1} parent=1 // pred_check_branch
      %42 = sbr.rel (0) target = $region17
    $region16: #{tpu_custom_call.1} parent=1 // pred_region
      _
    $region17: #{tpu_custom_call.1} parent=1 // pred_fallthru
      _
    // Predicated region
    $region18: #{tpu_custom_call.1} parent=1 // pred_check
      _
    $region19: #{tpu_custom_call.1} parent=1 // pred_check_branch
      %44 = sbr.rel (0) target = $region21
    $region20: #{tpu_custom_call.1} parent=1 // pred_region
      _
    $region21: #{tpu_custom_call.1} parent=1 // pred_fallthru
      _
    // Predicated region
    $region22: #{tpu_custom_call.1} parent=1 // pred_check
      _
    $region23: #{tpu_custom_call.1} parent=1 // pred_check_branch
      %46 = sbr.rel (0) target = $region25
    $region24: #{tpu_custom_call.1} parent=1 // pred_region
      %48 = dma.done [#allocation3], 256
    $region25: #{tpu_custom_call.1} parent=1 // pred_fallthru
      _
    // Predicated region
    $region26: #{tpu_custom_call.1} parent=1 // pred_check
      _
    $region27: #{tpu_custom_call.1} parent=1 // pred_check_branch
      %50 = sbr.rel (0) target = $region29
    $region28: #{tpu_custom_call.1} parent=1 // pred_region
      %52 = dma.done [#allocation6], 512
    $region29: #{tpu_custom_call.1} parent=1 // pred_fallthru
      _
    %v53 = vld [vmem:[#allocation2] sm:$0xff]
    %v54 = vld [vmem:[#allocation2 + $0x8] sm:$0xff]
    %v55 = vld [vmem:[#allocation5] sm:$0xff]
    %v56 = vld [vmem:[#allocation5 + $0x8] sm:$0xff]
    %v57 = vld [vmem:[#allocation5 + $0x10] sm:$0xff]
    %v58 = vld [vmem:[#allocation5 + $0x18] sm:$0xff]
    %v59 = vld [vmem:[%s2] sm:$0x1]
    %v61 = vperm.slane %v59, 0
    %vm63 = vcmask 261120
    %v65 = vsel %vm63, %v53, 0
    %v68 = vsel %vm63, %v54, 0
    %70 = vmatpush.msra.mxu0 0.0
    %71 = vmatpush.msra.mxu0 0.0
    %72 = vmatpush.msra.mxu0 0.0
    %73 = vmatpush.msra.mxu0 0.0
    %74 = vmatpush.msra.mxu0 0.0
    %75 = vmatpush.msra.mxu0 0.0
    %76 = vmatpush.msra.mxu0 0.0
    %77 = vmatpush.msra.mxu0 0.0
    %78 = vmatpush.msra.mxu0 0.0
    %79 = vmatpush.msra.mxu0 0.0
    %80 = vmatpush.msra.mxu0 0.0
    %81 = vmatpush.msra.mxu0 0.0
    %82 = vmatpush.msra.mxu0 %v58
    %83 = vmatpush.msra.mxu0 %v57
    %84 = vmatpush.msra.mxu0 %v56
    %85 = vmatpush.msra.mxu0 %v55
    %86 = vmatmul.f32.gmra.mxu0 %v65
    %v87 = vpop.f32.mrf.mxu0
    %v88 = vadd.f32 %v61, %v87
    %89 = vmatmul.f32.gmra.mxu0 %v68
    %v90 = vpop.f32.mrf.mxu0
    %v91 = vadd.f32 %v61, %v90
    %92 = vdwg.mxu0
    %v93 = vmul.f32 %v88, 0.5
    %v94 = vmul.f32 %v91, 0.5
    %v95 = vmul.f32 %v88, 0.70710677
    %v96 = vmul.f32 %v91, 0.70710677
    %v97 = vmul.f32 %v95, %v95
    %v98 = vmin.f32 16.0, %v97
    %v99 = vmul.f32 %v98, 2.1237322e-06
    %v100 = vadd.f32 %v99, 0.00028619796
    %v101 = vmul.f32 %v98, %v100
    %v102 = vadd.f32 %v101, 0.0036580483
    %v103 = vmul.f32 %v98, %v102
    %v104 = vadd.f32 %v103, 0.05243302
    %v105 = vmul.f32 %v98, %v104
    %v106 = vadd.f32 %v105, 0.18741608
    %v107 = vmul.f32 %v98, %v106
    %v108 = vadd.f32 %v107, 1.1283791
    %v109 = vmul.f32 %v95, %v108
    %v110 = vmul.f32 %v98, 3.8918573e-05
    %v111 = vadd.f32 %v110, 0.001143296
    %v112 = vmul.f32 %v98, %v111
    %v113 = vadd.f32 %v112, 0.014752088
    %v114 = vmul.f32 %v98, %v113
    %v115 = vadd.f32 %v114, 0.112945676
    %v116 = vmul.f32 %v98, %v115
    %v117 = vadd.f32 %v116, 0.4994258
    %v118 = vmul.f32 %v98, %v117
    %v119 = vadd.f32 %v118, 1.0
    %v120 = vrcp.pop %v119
    %v121 = vmul.f32 %v119, %v120
    %v122 = vsub.f32 1.0, %v121
    %v123 = vmul.f32 %v120, %v122
    %v124 = vadd.f32 %v120, %v123
    %vm125 = vweird.f32 %v119
    %vm126 = vweird.f32 %v120
    %vm127 = vmor %vm125, %vm126
    %v128 = vsel %vm127, %v120, %v124
    %v129 = vand.u32 2147483647, %v119
    %vm130 = vcmp.eq.f32.partialorder %v129, 8.507059e+37
    %v131 = vand.u32 %v119, 2147483648
    %v132 = vor.u32 1.1754944e-38, %v131
    %v133 = vsel %vm130, %v132, %v128
    %v134 = vmul.f32 %v109, %v133
    %v135 = vmin.f32 %v134, 1.0
    %v136 = vmax.f32 %v135, -1.0
    %v137 = vmul.f32 %v96, %v96
    %v138 = vmin.f32 16.0, %v137
    %v139 = vmul.f32 %v138, 2.1237322e-06
    %v140 = vadd.f32 %v139, 0.00028619796
    %v141 = vmul.f32 %v138, %v140
    %v142 = vadd.f32 %v141, 0.0036580483
    %v143 = vmul.f32 %v138, %v142
    %v144 = vadd.f32 %v143, 0.05243302
    %v145 = vmul.f32 %v138, %v144
    %v146 = vadd.f32 %v145, 0.18741608
    %v147 = vmul.f32 %v138, %v146
    %v148 = vadd.f32 %v147, 1.1283791
    %v149 = vmul.f32 %v96, %v148
    %v150 = vmul.f32 %v138, 3.8918573e-05
    %v151 = vadd.f32 %v150, 0.001143296
    %v152 = vmul.f32 %v138, %v151
    %v153 = vadd.f32 %v152, 0.014752088
    %v154 = vmul.f32 %v138, %v153
    %v155 = vadd.f32 %v154, 0.112945676
    %v156 = vmul.f32 %v138, %v155
    %v157 = vadd.f32 %v156, 0.4994258
    %v158 = vmul.f32 %v138, %v157
    %v159 = vadd.f32 %v158, 1.0
    %v160 = vrcp.pop %v159
    %v161 = vmul.f32 %v159, %v160
    %v162 = vsub.f32 1.0, %v161
    %v163 = vmul.f32 %v160, %v162
    %v164 = vadd.f32 %v160, %v163
    %vm165 = vweird.f32 %v159
    %vm166 = vweird.f32 %v160
    %vm167 = vmor %vm165, %vm166
    %v168 = vsel %vm167, %v160, %v164
    %v169 = vand.u32 2147483647, %v159
    %vm170 = vcmp.eq.f32.partialorder %v169, 8.507059e+37
    %v171 = vand.u32 %v159, 2147483648
    %v172 = vor.u32 1.1754944e-38, %v171
    %v173 = vsel %vm170, %v172, %v168
    %v174 = vmul.f32 %v149, %v173
    %v175 = vmin.f32 %v174, 1.0
    %v176 = vmax.f32 %v175, -1.0
    %v177 = vadd.f32 %v136, 1.0
    %v178 = vadd.f32 %v176, 1.0
    %v179 = vmul.f32 %v93, %v177
    %v180 = vmul.f32 %v94, %v178
    %v181 = vsel %vm63, %v179, 0.0
    %182 = vadd.xlane.f32.xlu0 %v181
    %v183 = vpop.xlane.xlu0 %182
    %v184 = vsel %vm63, %v180, 0.0
    %185 = vadd.xlane.f32.xlu0 %v184
    %v186 = vpop.xlane.xlu0 %185
    %v187 = vmul.f32 %v183, 0.03125
    %v188 = vmul.f32 %v186, 0.03125
    %v189 = vsub.f32 %v179, %v187
    %v190 = vsub.f32 %v180, %v188
    %v191 = vmul.f32 %v189, %v189
    %v192 = vmul.f32 %v190, %v190
    %v193 = vsel %vm63, %v191, 0.0
    %194 = vadd.xlane.f32.xlu0 %v193
    %v195 = vpop.xlane.xlu0 %194
    %v196 = vsel %vm63, %v192, 0.0
    %197 = vadd.xlane.f32.xlu0 %v196
    %v198 = vpop.xlane.xlu0 %197
    %v199 = vmul.f32 %v195, 0.03125
    %v200 = vmul.f32 %v198, 0.03125
    %v201 = vadd.f32 %v199, 1e-12
    %v202 = vadd.f32 %v200, 1e-12
    %v203 = vrsqrt.pop %v201
    %v204 = vmul.f32 %v203, %v201
    %v205 = vmul.f32 %v204, %v203
    %v206 = vmul.f32 0.5, %v205
    %v207 = vsub.f32 1.5, %v206
    %v208 = vmul.f32 %v203, %v207
    %vm209 = vweird.f32 %v201
    %vm210 = vweird.f32 %v203
    %vm211 = vmor %vm209, %vm210
    %v212 = vsel %vm211, %v203, %v208
    %v213 = vrsqrt.pop %v202
    %v214 = vmul.f32 %v213, %v202
    %v215 = vmul.f32 %v214, %v213
    %v216 = vmul.f32 0.5, %v215
    %v217 = vsub.f32 1.5, %v216
    %v218 = vmul.f32 %v213, %v217
    %vm219 = vweird.f32 %v202
    %vm220 = vweird.f32 %v213
    %vm221 = vmor %vm219, %vm220
    %v222 = vsel %vm221, %v213, %v218
    %v223 = vmul.f32 %v189, %v212
    %v224 = vmul.f32 %v190, %v222
    %v225 = vld [vmem:[%s3] sm:$0x1]
    %v227 = vperm.slane %v225, 0
    %v229 = vmul.f32 %v223, %v227
    %v230 = vmul.f32 %v224, %v227
    %v231 = vld [vmem:[%s4] sm:$0x1]
    %v233 = vperm.slane %v231, 0
    %v235 = vadd.f32 %v229, %v233
    %v236 = vadd.f32 %v230, %v233
    %237 = vst.msk [vmem:[#allocation7] sm:$0xff] %vm63, %v235
    %238 = vst.msk [vmem:[#allocation7 + $0x8] sm:$0xff] %vm63, %v236
    // Predicated region
    $region30: #{tpu_custom_call.1} parent=1 // pred_check
      _
    $region31: #{tpu_custom_call.1} parent=1 // pred_check_branch
      %240 = sbr.rel (0) target = $region33
    $region32: #{tpu_custom_call.1} parent=1 // pred_region
      %242 = vsyncadd [#allocation4], 0
      %s243 = sshll.u32 [#allocation7], 4
      %s244 = int_to_ptr.vmem [resolvable:$true] %s243
      %s245 = sshll.u32 %s5, 4
      %s246 = int_to_ptr.hbm [resolvable:$true] %s245
      %251 = dma.vmem_to_hbm [thread:$0]  %s244, 256, %s246, [#allocation4], 128, 128, 8
    $region33: #{tpu_custom_call.1} parent=1 // pred_fallthru
      _
    // Predicated region
    $region34: #{tpu_custom_call.1} parent=1 // pred_check
      _
    $region35: #{tpu_custom_call.1} parent=1 // pred_check_branch
      %253 = sbr.rel (0) target = $region37
    $region36: #{tpu_custom_call.1} parent=1 // pred_region
      %255 = dma.done [#allocation4], 256
    $region37: #{tpu_custom_call.1} parent=1 // pred_fallthru
      _
    %256 = vsyncpa [#allocation3], 1
    %257 = vsyncpa [#allocation6], 1
    %258 = vsyncpa [#allocation4], 1

</llo_original>
